<compile_context>
chip_gen: v7x
topology: tpu7x:2x2x1
jax: 0.10.0
libtpu: 0.0.40
codegen_flags: <defaults>
</compile_context>

<pallas_src>
import functools

import jax
import jax.numpy as jnp
from jax import lax
from jax.experimental import pallas as pl
from jax.experimental.pallas import tpu as pltpu


def _stable_softplus(x):
    # softplus(x) = log(1 + exp(x)), numerically stable (matches torch.nn.Softplus).
    return jnp.maximum(x, 0.0) + jnp.log1p(jnp.exp(-jnp.abs(x)))


def _partial_act_kernel(x_ref, wt_ref, o_ref, *, num_passive, use_mxu):
    x = x_ref[...]            # (tile_m, K)
    wt = wt_ref[...]          # (K, N) — columns already in final output order

    if use_mxu:
        y = jnp.dot(x, wt, preferred_element_type=jnp.float32)
    else:
        # K is tiny and static: VPU broadcast-FMA avoids MXU pad/drain overhead.
        xf = x.astype(jnp.float32)
        wf = wt.astype(jnp.float32)
        k_dim = x.shape[1]
        y = xf[:, 0:1] * wf[0:1, :]
        for k in range(1, k_dim):
            y = y + xf[:, k:k + 1] * wf[k:k + 1, :]

    # Softplus only on the trailing `num_active` output columns.
    col = lax.broadcasted_iota(jnp.int32, y.shape, 1)
    out = jnp.where(col >= num_passive, _stable_softplus(y), y)
    o_ref[...] = out.astype(o_ref.dtype)


def partial_activation_forward(x: jax.Array, weight: jax.Array, num_active: int) -> jax.Array:
    """Forward pass of PartialActivationLayer (sigma = Softplus).

    x:      (M, input_size)
    weight: (output_size, input_size)   — nn.Linear weight, no bias
    """
    M, K = x.shape
    N, K2 = weight.shape
    assert K == K2, "weight / input size mismatch"
    num_active = int(num_active)

    if num_active > 0:
        # Reorder output columns up front: [passive rows, active rows], so the
        # kernel writes the already-concatenated result directly.
        w_perm = jnp.concatenate([weight[num_active:], weight[:num_active]], axis=0)
        num_passive = N - num_active
    else:
        w_perm = weight
        num_passive = N  # mask never triggers -> plain linear
    wt = w_perm.T  # (K, N): kernel computes x @ wt with no in-kernel transpose

    # Row tiling: large blocks for the bandwidth-bound regime, cdiv grid with a
    # masked partial tail (no explicit padding, no post-slice copy).
    tile_m = M if M <= 2048 else 2048          # 2048 is a multiple of 8/16/32
    grid = (pl.cdiv(M, tile_m),)

    use_mxu = K > 8  # tiny contractions are cheaper on the VPU
    kernel = functools.partial(
        _partial_act_kernel, num_passive=num_passive, use_mxu=use_mxu
    )

    itemsize = jnp.dtype(x.dtype).itemsize
    cost = pl.CostEstimate(
        flops=2 * M * K * N + 4 * M * N,
        transcendentals=2 * M * max(num_active, 0),
        bytes_accessed=(M * K + K * N + M * N) * itemsize,
    )

    return pl.pallas_call(
        kernel,
        out_shape=jax.ShapeDtypeStruct((M, N), x.dtype),
        grid_spec=pltpu.PrefetchScalarGridSpec(
            num_scalar_prefetch=0,
            grid=grid,
            in_specs=[
                pl.BlockSpec((tile_m, K), lambda i: (i, 0)),
                pl.BlockSpec((K, N), lambda i: (0, 0)),
            ],
            out_specs=pl.BlockSpec((tile_m, N), lambda i: (i, 0)),
        ),
        compiler_params=pltpu.CompilerParams(
            dimension_semantics=("parallel",),
        ),
        cost_estimate=cost,
    )(x, wt)


if __name__ == "__main__":
    key = jax.random.PRNGKey(0)
    batch, input_size, output_size, num_active = 8, 2, 4, 2

    kx, kw = jax.random.split(key)
    x = jax.random.normal(kx, (batch, input_size), dtype=jnp.float32)

    # Emulate the PyTorch __init__ for the (output=4, input=2) case:
    # random Linear weight, then rows 2/3 overwritten with [[1,0],[0,1]].
    w = jax.random.normal(kw, (output_size, input_size), dtype=jnp.float32) * 0.5
    w = w.at[2, 0].set(1.0).at[3, 0].set(0.0).at[2, 1].set(0.0).at[3, 1].set(1.0)

    y = partial_activation_forward(x, w, num_active)
    y = jax.block_until_ready(y)

    # Pure-JAX reference of the PyTorch forward.
    lin = x @ w.T
    softplus = lambda v: jnp.logaddexp(v, 0.0)
    ref = jnp.concatenate(
        [lin[:, num_active:], softplus(lin[:, :num_active])], axis=1
    )

    assert y.shape == ref.shape and y.dtype == x.dtype
    assert jnp.allclose(y, ref, atol=1e-5, rtol=1e-5)

    print("KERNEL_OK")
</pallas_src>

<mosaic_0001>
module attributes {stable_mosaic.version = 11 : i64} {
  func.func @_partial_act_kernel(%arg0: i32, %arg1: memref<8x2xf32, #tpu.memory_space<vmem>>, %arg2: memref<2x4xf32, #tpu.memory_space<vmem>>, %arg3: memref<8x4xf32, #tpu.memory_space<vmem>>) attributes {dimension_semantics = [#tpu.dimension_semantics<parallel>], iteration_bounds = array<i64: 1>, scalar_prefetch = 0 : i64, scratch_operands = 0 : i64, tpu.core_type = #tpu.core_type<tc>, window_params = [{transform_indices = @transform_0, window_bounds = array<i64: 8, 2>}, {pipeline_mode = #tpu.pipeline_mode<synchronous>, transform_indices = @transform_1, window_bounds = array<i64: 2, 4>}, {transform_indices = @transform_2, window_bounds = array<i64: 8, 4>}]} {
    %c0 = arith.constant 0 : index
    %c0_0 = arith.constant 0 : index
    %0 = vector.load %arg1[%c0, %c0_0] : memref<8x2xf32, #tpu.memory_space<vmem>>, vector<8x2xf32>
    %c0_1 = arith.constant 0 : index
    %c0_2 = arith.constant 0 : index
    %1 = vector.load %arg2[%c0_1, %c0_2] : memref<2x4xf32, #tpu.memory_space<vmem>>, vector<2x4xf32>
    %2 = vector.extract_strided_slice %0 {offsets = [0, 0], sizes = [8, 1], strides = [1, 1]} : vector<8x2xf32> to vector<8x1xf32>
    %3 = vector.extract_strided_slice %1 {offsets = [0, 0], sizes = [1, 4], strides = [1, 1]} : vector<2x4xf32> to vector<1x4xf32>
    %4 = vector.broadcast %2 : vector<8x1xf32> to vector<8x4xf32>
    %5 = vector.broadcast %3 : vector<1x4xf32> to vector<8x4xf32>
    %6 = arith.mulf %4, %5 : vector<8x4xf32>
    %7 = vector.extract_strided_slice %0 {offsets = [0, 1], sizes = [8, 1], strides = [1, 1]} : vector<8x2xf32> to vector<8x1xf32>
    %8 = vector.extract_strided_slice %1 {offsets = [1, 0], sizes = [1, 4], strides = [1, 1]} : vector<2x4xf32> to vector<1x4xf32>
    %9 = vector.broadcast %7 : vector<8x1xf32> to vector<8x4xf32>
    %10 = vector.broadcast %8 : vector<1x4xf32> to vector<8x4xf32>
    %11 = arith.mulf %9, %10 : vector<8x4xf32>
    %12 = arith.addf %6, %11 : vector<8x4xf32>
    %13 = tpu.iota {dimensions = array<i32: 1>} : vector<8x4xi32>
    %c2_i32 = arith.constant 2 : i32
    %14 = vector.broadcast %c2_i32 : i32 to vector<8x4xi32>
    %15 = arith.cmpi sge, %13, %14 : vector<8x4xi32>
    %cst = arith.constant 0.000000e+00 : f32
    %16 = vector.broadcast %cst : f32 to vector<8x4xf32>
    %17 = arith.maximumf %12, %16 : vector<8x4xf32>
    %18 = math.absf %12 : vector<8x4xf32>
    %cst_3 = arith.constant 0.000000e+00 : f32
    %19 = vector.broadcast %cst_3 : f32 to vector<8x4xf32>
    %20 = arith.subf %19, %18 : vector<8x4xf32>
    %21 = math.exp %20 : vector<8x4xf32>
    %22 = math.log1p %21 : vector<8x4xf32>
    %23 = arith.addf %17, %22 : vector<8x4xf32>
    %24 = arith.select %15, %23, %12 : vector<8x4xi1>, vector<8x4xf32>
    %c0_4 = arith.constant 0 : index
    %c0_5 = arith.constant 0 : index
    %25 = vector.load %arg3[%c0_4, %c0_5] : memref<8x4xf32, #tpu.memory_space<vmem>>, vector<8x4xf32>
    tpu.vector_store %arg3[%c0_4, %c0_5], %24 {strides = array<i32>} : memref<8x4xf32, #tpu.memory_space<vmem>>, vector<8x4xf32>,
    return
  }
  func.func @transform_0(%arg0: i32) -> (i32, i32) {
    %c0_i32 = arith.constant 0 : i32
    %c0_i32_0 = arith.constant 0 : i32
    return %arg0, %c0_i32 : i32, i32
  }
  func.func @transform_1(%arg0: i32) -> (i32, i32) {
    %c0_i32 = arith.constant 0 : i32
    %c0_i32_0 = arith.constant 0 : i32
    %c0_i32_1 = arith.constant 0 : i32
    return %c0_i32, %c0_i32_0 : i32, i32
  }
  func.func @transform_2(%arg0: i32) -> (i32, i32) {
    %c0_i32 = arith.constant 0 : i32
    %c0_i32_0 = arith.constant 0 : i32
    return %arg0, %c0_i32 : i32, i32
  }
}

</mosaic_0001>

<llo_original>
// kernel: tpu_custom_call.1
$region0: #{tpu_custom_call.1}
  #allocation0 [shape = 'u32[]', space=smem, size = 0x4, offset = 0x4, fixed_abs, tag = 'smem constant byte address 0x4 - core index']
  #allocation1 [shape = 'u32[144,128]{1,0:T(1,128)}', space=vmem, size = 0x12000, scoped, tag = 'internal scratch']
  %s0 = inlined_call_operand.vmem [shape: f32[8,2], index: 0, kind: input, shape index: {}]
  %s1 = inlined_call_operand.vmem [shape: f32[2,4], index: 1, kind: input, shape index: {}]
  %s2 = inlined_call_operand.vmem [shape: f32[8,4], index: 2, kind: output, shape index: {}]
  %s3 = sld [smem:[#allocation0]]
  $region18: #{tpu_custom_call.1} parent=0
    _
  %s5 = ssub.s32 1, %s3
  %s6 = scalar_select 0, %s5, %s3
  // Predicated region
  $region2: #{tpu_custom_call.1} parent=0 // pred_check
    _
  $region3: #{tpu_custom_call.1} parent=0 // pred_check_branch
    %8 = sbr.rel (0) target = $region5
  $region4: #{tpu_custom_call.1} parent=0 // pred_region
    _
  $region5: #{tpu_custom_call.1} parent=0 // pred_fallthru
    _
  // Predicated region
  $region6: #{tpu_custom_call.1} parent=0 // pred_check
    _
  $region7: #{tpu_custom_call.1} parent=0 // pred_check_branch
    %10 = sbr.rel (0) target = $region9
  $region8: #{tpu_custom_call.1} parent=0 // pred_region
    _
  $region9: #{tpu_custom_call.1} parent=0 // pred_fallthru
    _
  %v11 = vld [vmem:[%s0] sm:$0xff]
  %v12 = vld [vmem:[%s1] sm:$0x3]
  %14 = vset.pattern.permute.xlu0 0
  %15 = vperm.xlu0 %14, %v11
  %v16 = vpop.permute.xlu0 %15
  %v18 = vlaneseq
  %v19 = vshrl.u32 %v18, 7
  %v20 = vsub.s32 0, %v19
  %v21 = vrot.slane %v12, %v20
  %v22 = vmul.f32 %v16, %v21
  %23 = vset.pattern.permute.xlu0 1
  %24 = vperm.xlu0 %23, %v11
  %v25 = vpop.permute.xlu0 %24
  %v27 = vlaneseq
  %v28 = vshrl.u32 %v27, 7
  %v29 = vsub.s32 1, %v28
  %v30 = vrot.slane %v12, %v29
  %v31 = vmul.f32 %v25, %v30
  %v32 = vadd.f32 %v22, %v31
  %v33 = vlaneseq
  %v34 = vand.u32 %v33, 127
  %vm35 = vcmp.ge.s32.totalorder %v34, 2
  %v36 = vmax.f32 %v32, 0.0
  %v37 = vand.u32 2147483647, %v32
  %v38 = vsub.f32 0.0, %v37
  %v39 = vmul.f32 %v38, 1.442695
  %v40 = vpow.pop %v39
  %v41 = vadd.f32 %v40, 1.0
  %v42 = vlog2.pop %v41
  %v43 = vmul.f32 %v42, 0.6931472
  %v44 = vmul.f32 -0.5, %v40
  %v45 = vadd.f32 %v44, 1.0
  %v46 = vmul.f32 %v45, %v40
  %v47 = vand.u32 2147483647, %v40
  %vm48 = vcmp.lt.f32.partialorder %v47, 0.0004427343
  %v49 = vsel %vm48, %v46, %v43
  %v50 = vadd.f32 %v36, %v49
  %v51 = vsel %vm35, %v50, %v32
  %vm52 = vcmask 31744
  %53 = vst.msk [vmem:[%s2] sm:$0xff] %vm52, %v51
  // Predicated region
  $region10: #{tpu_custom_call.1} parent=0 // pred_check
    _
  $region11: #{tpu_custom_call.1} parent=0 // pred_check_branch
    %55 = sbr.rel (0) target = $region13
  $region12: #{tpu_custom_call.1} parent=0 // pred_region
    _
  $region13: #{tpu_custom_call.1} parent=0 // pred_fallthru
    _
  // Predicated region
  $region14: #{tpu_custom_call.1} parent=0 // pred_check
    _
  $region15: #{tpu_custom_call.1} parent=0 // pred_check_branch
    %57 = sbr.rel (0) target = $region17
  $region16: #{tpu_custom_call.1} parent=0 // pred_region
    _
  $region17: #{tpu_custom_call.1} parent=0 // pred_fallthru
    _

</llo_original>
